<compile_context>
chip_gen: v7x
topology: tpu7x:2x2x1
jax: 0.10.0
libtpu: 0.0.40
codegen_flags: <defaults>
</compile_context>

<pallas_src>
import jax
import jax.numpy as jnp
from jax.experimental import pallas as pl
from jax.experimental.pallas import tpu as pltpu


def _round_up(v, m):
    return ((v + m - 1) // m) * m


def _cdiv(a, b):
    return (a + b - 1) // b


def bbox_head_kernel(x_ref, w1_ref, w2_ref, w3_ref, b1_ref, b2_ref, b3_ref,
                     a_ref, o_ref):
    # x tile: (TM, 256) in its HBM dtype (f32 or bf16).  Cast to bf16 on the VPU
    # right before the MXU — avoids a separate wrapper-side HBM cast pass.
    x = x_ref[...].astype(jnp.bfloat16)

    a1 = a_ref[0].astype(jnp.bfloat16)   # PReLU slopes (single shared weight each)
    a2 = a_ref[1]

    h1 = jnp.dot(x, w1_ref[...], preferred_element_type=jnp.float32)   # (TM, 64) f32
    # Layer-1 epilogue in bf16: halves VALU work on the widest intermediate and
    # feeds the next matmul without another cast.
    h1 = (h1 + b1_ref[...]).astype(jnp.bfloat16)
    h1 = jnp.where(h1 > 0, h1, a1 * h1)                                 # PReLU

    h2 = jnp.dot(h1, w2_ref[...], preferred_element_type=jnp.float32)  # (TM, 16) f32
    h2 = h2 + b2_ref[...]
    h2 = jnp.where(h2 > 0, h2, a2 * h2)                                 # PReLU

    h3 = jnp.dot(h2.astype(jnp.bfloat16), w3_ref[...],
                 preferred_element_type=jnp.float32)                    # (TM, 4) f32
    o_ref[...] = (h3 + b3_ref[...]).astype(o_ref.dtype)


def bounding_box_head(x, params, *, tm=4096):
    """x: (batch, instances, in_features) f32 or bf16 -> (batch, instances, 4) f32."""
    b, inst, f_in = x.shape
    (w1, b1, a1, w2, b2, a2, w3, b3) = params
    f_out = w3.shape[1]

    m = b * inst
    x2d = x.reshape(m, f_in)   # contiguous reshape: metadata-only, no HBM copy

    # Row tile: multiple of 8 (sublane rule); capped so the grid keeps >= ~4 steps
    # (both v7x TensorCores busy + real double-buffer overlap) while the default
    # 4096-row f32 tile stays inside every generation's scoped-VMEM default.
    tm_req = max(8, (tm // 8) * 8)
    tm_cap = max(8, _round_up(_cdiv(m, 4), 8))
    tm_eff = min(tm_req, tm_cap)
    grid = (_cdiv(m, tm_eff),)   # ragged last tile -> partial block, masked writes

    # Weights are tiny (~17K params): bf16 residents for the MXU.
    w1b = w1.astype(jnp.bfloat16)
    w2b = w2.astype(jnp.bfloat16)
    w3b = w3.astype(jnp.bfloat16)

    # Pack the two PReLU scalars into one small SMEM vector.
    a_vec = jnp.concatenate([a1.reshape(-1), a2.reshape(-1)]).astype(jnp.float32)

    resident = lambda shape: pl.BlockSpec(shape, lambda i: (0, 0))

    itemsize = x2d.dtype.itemsize
    cost = pl.CostEstimate(
        flops=2 * m * (w1.shape[0] * w1.shape[1]
                       + w2.shape[0] * w2.shape[1]
                       + w3.shape[0] * w3.shape[1]),
        transcendentals=0,
        bytes_accessed=(m * f_in * itemsize                     # x read
                        + 2 * (w1.size + w2.size + w3.size)     # bf16 weights
                        + 4 * (b1.size + b2.size + b3.size + 2) # biases + slopes
                        + m * f_out * 4),                       # f32 output
    )

    out2d = pl.pallas_call(
        bbox_head_kernel,
        out_shape=jax.ShapeDtypeStruct((m, f_out), jnp.float32),
        grid=grid,
        in_specs=[
            pl.BlockSpec((tm_eff, f_in), lambda i: (i, 0)),      # x: pipelined tiles
            resident(w1b.shape), resident(w2b.shape), resident(w3b.shape),
            resident(b1.shape), resident(b2.shape), resident(b3.shape),
            pl.BlockSpec(memory_space=pltpu.MemorySpace.SMEM),   # PReLU scalars
        ],
        out_specs=pl.BlockSpec((tm_eff, f_out), lambda i: (i, 0)),
        compiler_params=pltpu.CompilerParams(
            dimension_semantics=("parallel",)),
        cost_estimate=cost,
    )(x2d, w1b, w2b, w3b, b1, b2, b3, a_vec)

    return out2d.reshape(b, inst, f_out)


def init_params(key, features=((256, 64), (64, 16), (16, 4))):
    """Deterministic synthetic init mimicking nn.Linear (uniform +/- 1/sqrt(in))
    and nn.PReLU (single weight = 0.25). Weights stored as (in, out)."""
    params = []
    keys = jax.random.split(key, 2 * len(features))
    for idx, (fi, fo) in enumerate(features):
        bound = 1.0 / (fi ** 0.5)
        w = jax.random.uniform(keys[2 * idx], (fi, fo), jnp.float32, -bound, bound)
        bias = jax.random.uniform(keys[2 * idx + 1], (1, fo), jnp.float32, -bound, bound)
        params.extend([w, bias])
        if idx < len(features) - 1:
            params.append(jnp.full((1, 1), 0.25, jnp.float32))  # PReLU weight
    return tuple(params)


def reference_forward(x, params):
    (w1, b1, a1, w2, b2, a2, w3, b3) = params
    h = x @ w1 + b1
    h = jnp.where(h > 0, h, a1 * h)
    h = h @ w2 + b2
    h = jnp.where(h > 0, h, a2 * h)
    return h @ w3 + b3


if __name__ == "__main__":
    key = jax.random.PRNGKey(0)
    k_x, k_p, k_x2 = jax.random.split(key, 3)

    params = init_params(k_p)

    # Small shape matching the module's (batch, instances, features) contract.
    batch, instances, in_features = 2, 8, 256
    x = jax.random.normal(k_x, (batch, instances, in_features), jnp.float32)

    out = bounding_box_head(x, params)
    out = jax.block_until_ready(out)
    ref = reference_forward(x, params)
    assert out.shape == (batch, instances, 4)
    # bf16 matmul inputs / bf16 layer-1 epilogue (f32 accumulation) -> loosened
    # tolerance vs the f32 reference; a deliberate accuracy/bandwidth tradeoff.
    assert jnp.allclose(out, ref, atol=2e-2, rtol=2e-2)

    # Second check exercising the multi-tile grid + ragged-M partial-block path
    # (M = 400 -> tm_eff = 104, 4 grid steps, last tile has 88 valid rows).
    b2_, i2_ = 4, 100
    x2 = jax.random.normal(k_x2, (b2_, i2_, in_features), jnp.float32)
    out2 = jax.block_until_ready(bounding_box_head(x2, params, tm=128))
    ref2 = reference_forward(x2, params)
    assert out2.shape == (b2_, i2_, 4)
    assert jnp.allclose(out2, ref2, atol=2e-2, rtol=2e-2)

    print("KERNEL_OK")
</pallas_src>

<mosaic_0001>
module attributes {stable_mosaic.version = 11 : i64} {
  func.func @bbox_head_kernel(%arg0: i32, %arg1: memref<8x256xf32, #tpu.memory_space<vmem>>, %arg2: memref<256x64xbf16, #tpu.memory_space<vmem>>, %arg3: memref<64x16xbf16, #tpu.memory_space<vmem>>, %arg4: memref<16x4xbf16, #tpu.memory_space<vmem>>, %arg5: memref<1x64xf32, #tpu.memory_space<vmem>>, %arg6: memref<1x16xf32, #tpu.memory_space<vmem>>, %arg7: memref<1x4xf32, #tpu.memory_space<vmem>>, %arg8: memref<2xf32, #tpu.memory_space<smem>>, %arg9: memref<8x4xf32, #tpu.memory_space<vmem>>) attributes {dimension_semantics = [#tpu.dimension_semantics<parallel>], iteration_bounds = array<i64: 2>, scalar_prefetch = 0 : i64, scratch_operands = 0 : i64, tpu.core_type = #tpu.core_type<tc>, window_params = [{transform_indices = @transform_0, window_bounds = array<i64: 8, 256>}, {pipeline_mode = #tpu.pipeline_mode<synchronous>, transform_indices = @transform_1, window_bounds = array<i64: 256, 64>}, {pipeline_mode = #tpu.pipeline_mode<synchronous>, transform_indices = @transform_2, window_bounds = array<i64: 64, 16>}, {pipeline_mode = #tpu.pipeline_mode<synchronous>, transform_indices = @transform_3, window_bounds = array<i64: 16, 4>}, {pipeline_mode = #tpu.pipeline_mode<synchronous>, transform_indices = @transform_4, window_bounds = array<i64: 1, 64>}, {pipeline_mode = #tpu.pipeline_mode<synchronous>, transform_indices = @transform_5, window_bounds = array<i64: 1, 16>}, {pipeline_mode = #tpu.pipeline_mode<synchronous>, transform_indices = @transform_6, window_bounds = array<i64: 1, 4>}, {transform_indices = @transform_7, window_bounds = array<i64: 2>}, {transform_indices = @transform_8, window_bounds = array<i64: 8, 4>}]} {
    %c0 = arith.constant 0 : index
    %c0_0 = arith.constant 0 : index
    %0 = vector.load %arg1[%c0, %c0_0] : memref<8x256xf32, #tpu.memory_space<vmem>>, vector<8x256xf32>
    %1 = arith.truncf %0 : vector<8x256xf32> to vector<8x256xbf16>
    %c0_1 = arith.constant 0 : index
    %2 = memref.load %arg8[%c0_1] : memref<2xf32, #tpu.memory_space<smem>>
    %3 = arith.truncf %2 : f32 to bf16
    %c1 = arith.constant 1 : index
    %4 = memref.load %arg8[%c1] : memref<2xf32, #tpu.memory_space<smem>>
    %c0_2 = arith.constant 0 : index
    %c0_3 = arith.constant 0 : index
    %5 = vector.load %arg2[%c0_2, %c0_3] : memref<256x64xbf16, #tpu.memory_space<vmem>>, vector<256x64xbf16>
    %cst = arith.constant dense<0.000000e+00> : vector<8x64xf32>
    %6 = tpu.matmul %1, %5, %cst {dimension_numbers = #tpu.dot_dimension_numbers<[1], [0], [0], [1], [0, 0, 1, 1], [], []>} : vector<8x256xbf16>, vector<256x64xbf16>, vector<8x64xf32> -> vector<8x64xf32>
    %c0_4 = arith.constant 0 : index
    %c0_5 = arith.constant 0 : index
    %7 = vector.load %arg5[%c0_4, %c0_5] : memref<1x64xf32, #tpu.memory_space<vmem>>, vector<1x64xf32>
    %8 = vector.broadcast %7 : vector<1x64xf32> to vector<8x64xf32>
    %9 = arith.addf %6, %8 : vector<8x64xf32>
    %10 = arith.truncf %9 : vector<8x64xf32> to vector<8x64xbf16>
    %cst_6 = arith.constant 0.000000e+00 : bf16
    %11 = vector.broadcast %cst_6 : bf16 to vector<8x64xbf16>
    %12 = arith.cmpf ogt, %10, %11 : vector<8x64xbf16>
    %13 = vector.broadcast %3 : bf16 to vector<8x64xbf16>
    %14 = arith.mulf %13, %10 : vector<8x64xbf16>
    %15 = arith.select %12, %10, %14 : vector<8x64xi1>, vector<8x64xbf16>
    %c0_7 = arith.constant 0 : index
    %c0_8 = arith.constant 0 : index
    %16 = vector.load %arg3[%c0_7, %c0_8] : memref<64x16xbf16, #tpu.memory_space<vmem>>, vector<64x16xbf16>
    %cst_9 = arith.constant dense<0.000000e+00> : vector<8x16xf32>
    %17 = tpu.matmul %15, %16, %cst_9 {dimension_numbers = #tpu.dot_dimension_numbers<[1], [0], [0], [1], [0, 0, 1, 1], [], []>} : vector<8x64xbf16>, vector<64x16xbf16>, vector<8x16xf32> -> vector<8x16xf32>
    %c0_10 = arith.constant 0 : index
    %c0_11 = arith.constant 0 : index
    %18 = vector.load %arg6[%c0_10, %c0_11] : memref<1x16xf32, #tpu.memory_space<vmem>>, vector<1x16xf32>
    %19 = vector.broadcast %18 : vector<1x16xf32> to vector<8x16xf32>
    %20 = arith.addf %17, %19 : vector<8x16xf32>
    %cst_12 = arith.constant 0.000000e+00 : f32
    %21 = vector.broadcast %cst_12 : f32 to vector<8x16xf32>
    %22 = arith.cmpf ogt, %20, %21 : vector<8x16xf32>
    %23 = vector.broadcast %4 : f32 to vector<8x16xf32>
    %24 = arith.mulf %23, %20 : vector<8x16xf32>
    %25 = arith.select %22, %20, %24 : vector<8x16xi1>, vector<8x16xf32>
    %26 = arith.truncf %25 : vector<8x16xf32> to vector<8x16xbf16>
    %c0_13 = arith.constant 0 : index
    %c0_14 = arith.constant 0 : index
    %27 = vector.load %arg4[%c0_13, %c0_14] : memref<16x4xbf16, #tpu.memory_space<vmem>>, vector<16x4xbf16>
    %cst_15 = arith.constant dense<0.000000e+00> : vector<8x4xf32>
    %28 = tpu.matmul %26, %27, %cst_15 {dimension_numbers = #tpu.dot_dimension_numbers<[1], [0], [0], [1], [0, 0, 1, 1], [], []>} : vector<8x16xbf16>, vector<16x4xbf16>, vector<8x4xf32> -> vector<8x4xf32>
    %c0_16 = arith.constant 0 : index
    %c0_17 = arith.constant 0 : index
    %29 = vector.load %arg7[%c0_16, %c0_17] : memref<1x4xf32, #tpu.memory_space<vmem>>, vector<1x4xf32>
    %30 = vector.broadcast %29 : vector<1x4xf32> to vector<8x4xf32>
    %31 = arith.addf %28, %30 : vector<8x4xf32>
    %c0_18 = arith.constant 0 : index
    %c0_19 = arith.constant 0 : index
    %32 = vector.load %arg9[%c0_18, %c0_19] : memref<8x4xf32, #tpu.memory_space<vmem>>, vector<8x4xf32>
    tpu.vector_store %arg9[%c0_18, %c0_19], %31 {strides = array<i32>} : memref<8x4xf32, #tpu.memory_space<vmem>>, vector<8x4xf32>,
    return
  }
  func.func @transform_0(%arg0: i32) -> (i32, i32) {
    %c0_i32 = arith.constant 0 : i32
    %c0_i32_0 = arith.constant 0 : i32
    return %arg0, %c0_i32 : i32, i32
  }
  func.func @transform_1(%arg0: i32) -> (i32, i32) {
    %c0_i32 = arith.constant 0 : i32
    %c0_i32_0 = arith.constant 0 : i32
    %c0_i32_1 = arith.constant 0 : i32
    return %c0_i32, %c0_i32_0 : i32, i32
  }
  func.func @transform_2(%arg0: i32) -> (i32, i32) {
    %c0_i32 = arith.constant 0 : i32
    %c0_i32_0 = arith.constant 0 : i32
    %c0_i32_1 = arith.constant 0 : i32
    return %c0_i32, %c0_i32_0 : i32, i32
  }
  func.func @transform_3(%arg0: i32) -> (i32, i32) {
    %c0_i32 = arith.constant 0 : i32
    %c0_i32_0 = arith.constant 0 : i32
    %c0_i32_1 = arith.constant 0 : i32
    return %c0_i32, %c0_i32_0 : i32, i32
  }
  func.func @transform_4(%arg0: i32) -> (i32, i32) {
    %c0_i32 = arith.constant 0 : i32
    %c0_i32_0 = arith.constant 0 : i32
    %c0_i32_1 = arith.constant 0 : i32
    return %c0_i32, %c0_i32_0 : i32, i32
  }
  func.func @transform_5(%arg0: i32) -> (i32, i32) {
    %c0_i32 = arith.constant 0 : i32
    %c0_i32_0 = arith.constant 0 : i32
    %c0_i32_1 = arith.constant 0 : i32
    return %c0_i32, %c0_i32_0 : i32, i32
  }
  func.func @transform_6(%arg0: i32) -> (i32, i32) {
    %c0_i32 = arith.constant 0 : i32
    %c0_i32_0 = arith.constant 0 : i32
    %c0_i32_1 = arith.constant 0 : i32
    return %c0_i32, %c0_i32_0 : i32, i32
  }
  func.func @transform_7(%arg0: i32) -> i32 {
    %c0_i32 = arith.constant 0 : i32
    %c0_i32_0 = arith.constant 0 : i32
    return %c0_i32 : i32
  }
  func.func @transform_8(%arg0: i32) -> (i32, i32) {
    %c0_i32 = arith.constant 0 : i32
    %c0_i32_0 = arith.constant 0 : i32
    return %arg0, %c0_i32 : i32, i32
  }
}

</mosaic_0001>

<llo_original>
// kernel: tpu_custom_call.1
$region0: #{tpu_custom_call.1}
  #allocation0 [shape = 'u32[]', space=smem, size = 0x4, offset = 0x4, fixed_abs, tag = 'smem constant byte address 0x4 - core index']
  #allocation1 [shape = 'u32[144,128]{1,0:T(1,128)}', space=vmem, size = 0x12000, scoped, tag = 'internal scratch']
  %s0 = inlined_call_operand.vmem [shape: f32[16,256], index: 0, kind: input, shape index: {}]
  %s1 = inlined_call_operand.vmem [shape: bf16[256,64], index: 1, kind: input, shape index: {}]
  %s2 = inlined_call_operand.vmem [shape: bf16[64,16], index: 2, kind: input, shape index: {}]
  %s3 = inlined_call_operand.vmem [shape: bf16[16,4], index: 3, kind: input, shape index: {}]
  %s4 = inlined_call_operand.vmem [shape: f32[1,64], index: 4, kind: input, shape index: {}]
  %s5 = inlined_call_operand.vmem [shape: f32[1,16], index: 5, kind: input, shape index: {}]
  %s6 = inlined_call_operand.vmem [shape: f32[1,4], index: 6, kind: input, shape index: {}]
  %s7 = inlined_call_operand.vmem [shape: f32[2], index: 7, kind: input, shape index: {}]
  %s8 = inlined_call_operand.vmem [shape: f32[16,4], index: 8, kind: output, shape index: {}]
  %s9 = sld [smem:[#allocation0]]
  $region69: #{tpu_custom_call.1} parent=0
    _
  %s11 = ssub.s32 1, %s9
  %s12 = scalar_select 0, %s11, %s9
  $region1: #{tpu_custom_call.1} parent=0
    #allocation2 [shape = 'u8[512]{0}', space=smem, size = 0x200, scoped, tag = 'input window, operand 7, single buffered']
    #allocation3 [shape = 's32[2]{0}', space=sflag, size = 0x8, scoped, tag = 'scoped memory for tpu_custom_call.1']
    %13 = vsyncpa [#allocation3], 0
    loop: start=0, step=1, limit=4
    $region2: #{tpu_custom_call.1} parent=1 // loop_pre_header
      _
    $region3: #{tpu_custom_call.1} parent=1 // loop_header
      %s15 = sphi 0, %s19
      %p16 = scmp.ge.s32.totalorder %s15, 4
      %s25 = sphi 0, %s27
      %s28 = sphi 0, %s25
      %s29 = sphi 0, %s28
      %s45 = sphi 0, %s29
      %s49 = sphi 0, %s49
      %s51 = sphi 0, %s49
      %s52 = sphi 0, %s51
      %s66 = sphi 0, %s52
      %s70 = sphi 0, %s70
      %s72 = sphi 0, %s70
      %s73 = sphi 0, %s72
      %s87 = sphi 0, %s73
      %s91 = sphi 0, %s91
      %s93 = sphi 0, %s91
      %s94 = sphi 0, %s93
      %s108 = sphi 0, %s94
      %s112 = sphi 0, %s112
      %s114 = sphi 0, %s112
      %s115 = sphi 0, %s114
      %s129 = sphi 0, %s115
      %s133 = sphi 0, %s133
      %s135 = sphi 0, %s133
      %s136 = sphi 0, %s135
      %s150 = sphi 0, %s136
      %s154 = sphi 0, %s154
      %s156 = sphi 0, %s154
      %s157 = sphi 0, %s156
      %s171 = sphi 0, %s157
      %s175 = sphi 0, %s175
      %s177 = sphi 0, %s175
      %s178 = sphi 0, %s177
      %s192 = sphi 0, %s178
      %s198 = sphi 0, %s200
      %s201 = sphi 0, %s198
      %s202 = sphi 0, %s201
      %s218 = sphi 0, %s202
    $region4: #{tpu_custom_call.1} parent=1 // loop_header_branch
      %18 = sbr.rel (%p16) target = $region8
    $region5: #{tpu_custom_call.1} parent=1 // loop_body
      %s20 = ssub.s32 %s15, 1
      %s21 = ssub.s32 %s15, 2
      %s22 = sadd.s32 %s15, 1
      %s23 = ssub.s32 %s15, %s22
      %p24 = scmp.eq.s32.totalorder %s23, 0
      %s26 = sadd.s32 %s25, 1
      %s27 = scalar_select %p24, %s25, %s26
      %p30 = pneg %p24
      %p31 = scmp.eq.s32.totalorder %s15, 1
      %p32 = por %p30, %p31
      %p33 = scmp.ne.s32.totalorder %s25, %s28
      %p34 = scmp.eq.s32.totalorder %s15, 0
      %p35 = por %p33, %p34
      %p36 = scmp.ne.s32.totalorder %s25, %s28
      %p37 = scmp.eq.s32.totalorder %s20, 1
      %p38 = por %p36, %p37
      %p39 = scmp.ne.s32.totalorder %s28, %s29
      %p40 = scmp.eq.s32.totalorder %s20, 0
      %p41 = por %p39, %p40
      %p42 = scmp.ne.s32.totalorder %s28, %s29
      %p43 = scmp.eq.s32.totalorder %s21, 1
      %p44 = por %p42, %p43
      %p46 = scmp.ne.s32.totalorder %s29, %s45
      %p47 = scmp.eq.s32.totalorder %s21, 0
      %p48 = por %p46, %p47
      %s50 = sadd.s32 %s49, 1
      %p53 = scmp.eq.s32.totalorder %s15, 1
      %p54 = scmp.ne.s32.totalorder %s49, %s51
      %p55 = scmp.eq.s32.totalorder %s15, 0
      %p56 = por %p54, %p55
      %p57 = scmp.ne.s32.totalorder %s49, %s51
      %p58 = scmp.eq.s32.totalorder %s20, 1
      %p59 = por %p57, %p58
      %p60 = scmp.ne.s32.totalorder %s51, %s52
      %p61 = scmp.eq.s32.totalorder %s20, 0
      %p62 = por %p60, %p61
      %p63 = scmp.ne.s32.totalorder %s51, %s52
      %p64 = scmp.eq.s32.totalorder %s21, 1
      %p65 = por %p63, %p64
      %p67 = scmp.ne.s32.totalorder %s52, %s66
      %p68 = scmp.eq.s32.totalorder %s21, 0
      %p69 = por %p67, %p68
      %s71 = sadd.s32 %s70, 1
      %p74 = scmp.eq.s32.totalorder %s15, 1
      %p75 = scmp.ne.s32.totalorder %s70, %s72
      %p76 = scmp.eq.s32.totalorder %s15, 0
      %p77 = por %p75, %p76
      %p78 = scmp.ne.s32.totalorder %s70, %s72
      %p79 = scmp.eq.s32.totalorder %s20, 1
      %p80 = por %p78, %p79
      %p81 = scmp.ne.s32.totalorder %s72, %s73
      %p82 = scmp.eq.s32.totalorder %s20, 0
      %p83 = por %p81, %p82
      %p84 = scmp.ne.s32.totalorder %s72, %s73
      %p85 = scmp.eq.s32.totalorder %s21, 1
      %p86 = por %p84, %p85
      %p88 = scmp.ne.s32.totalorder %s73, %s87
      %p89 = scmp.eq.s32.totalorder %s21, 0
      %p90 = por %p88, %p89
      %s92 = sadd.s32 %s91, 1
      %p95 = scmp.eq.s32.totalorder %s15, 1
      %p96 = scmp.ne.s32.totalorder %s91, %s93
      %p97 = scmp.eq.s32.totalorder %s15, 0
      %p98 = por %p96, %p97
      %p99 = scmp.ne.s32.totalorder %s91, %s93
      %p100 = scmp.eq.s32.totalorder %s20, 1
      %p101 = por %p99, %p100
      %p102 = scmp.ne.s32.totalorder %s93, %s94
      %p103 = scmp.eq.s32.totalorder %s20, 0
      %p104 = por %p102, %p103
      %p105 = scmp.ne.s32.totalorder %s93, %s94
      %p106 = scmp.eq.s32.totalorder %s21, 1
      %p107 = por %p105, %p106
      %p109 = scmp.ne.s32.totalorder %s94, %s108
      %p110 = scmp.eq.s32.totalorder %s21, 0
      %p111 = por %p109, %p110
      %s113 = sadd.s32 %s112, 1
      %p116 = scmp.eq.s32.totalorder %s15, 1
      %p117 = scmp.ne.s32.totalorder %s112, %s114
      %p118 = scmp.eq.s32.totalorder %s15, 0
      %p119 = por %p117, %p118
      %p120 = scmp.ne.s32.totalorder %s112, %s114
      %p121 = scmp.eq.s32.totalorder %s20, 1
      %p122 = por %p120, %p121
      %p123 = scmp.ne.s32.totalorder %s114, %s115
      %p124 = scmp.eq.s32.totalorder %s20, 0
      %p125 = por %p123, %p124
      %p126 = scmp.ne.s32.totalorder %s114, %s115
      %p127 = scmp.eq.s32.totalorder %s21, 1
      %p128 = por %p126, %p127
      %p130 = scmp.ne.s32.totalorder %s115, %s129
      %p131 = scmp.eq.s32.totalorder %s21, 0
      %p132 = por %p130, %p131
      %s134 = sadd.s32 %s133, 1
      %p137 = scmp.eq.s32.totalorder %s15, 1
      %p138 = scmp.ne.s32.totalorder %s133, %s135
      %p139 = scmp.eq.s32.totalorder %s15, 0
      %p140 = por %p138, %p139
      %p141 = scmp.ne.s32.totalorder %s133, %s135
      %p142 = scmp.eq.s32.totalorder %s20, 1
      %p143 = por %p141, %p142
      %p144 = scmp.ne.s32.totalorder %s135, %s136
      %p145 = scmp.eq.s32.totalorder %s20, 0
      %p146 = por %p144, %p145
      %p147 = scmp.ne.s32.totalorder %s135, %s136
      %p148 = scmp.eq.s32.totalorder %s21, 1
      %p149 = por %p147, %p148
      %p151 = scmp.ne.s32.totalorder %s136, %s150
      %p152 = scmp.eq.s32.totalorder %s21, 0
      %p153 = por %p151, %p152
      %s155 = sadd.s32 %s154, 1
      %p158 = scmp.eq.s32.totalorder %s15, 1
      %p159 = scmp.ne.s32.totalorder %s154, %s156
      %p160 = scmp.eq.s32.totalorder %s15, 0
      %p161 = por %p159, %p160
      %p162 = scmp.ne.s32.totalorder %s154, %s156
      %p163 = scmp.eq.s32.totalorder %s20, 1
      %p164 = por %p162, %p163
      %p165 = scmp.ne.s32.totalorder %s156, %s157
      %p166 = scmp.eq.s32.totalorder %s20, 0
      %p167 = por %p165, %p166
      %p168 = scmp.ne.s32.totalorder %s156, %s157
      %p169 = scmp.eq.s32.totalorder %s21, 1
      %p170 = por %p168, %p169
      %p172 = scmp.ne.s32.totalorder %s157, %s171
      %p173 = scmp.eq.s32.totalorder %s21, 0
      %p174 = por %p172, %p173
      %s176 = sadd.s32 %s175, 1
      %p179 = scmp.eq.s32.totalorder %s15, 1
      %p180 = scmp.ne.s32.totalorder %s175, %s177
      %p181 = scmp.eq.s32.totalorder %s15, 0
      %p182 = por %p180, %p181
      %p183 = scmp.ne.s32.totalorder %s175, %s177
      %p184 = scmp.eq.s32.totalorder %s20, 1
      %p185 = por %p183, %p184
      %p186 = scmp.ne.s32.totalorder %s177, %s178
      %p187 = scmp.eq.s32.totalorder %s20, 0
      %p188 = por %p186, %p187
      %p189 = scmp.ne.s32.totalorder %s177, %s178
      %p190 = scmp.eq.s32.totalorder %s21, 1
      %p191 = por %p189, %p190
      %p193 = scmp.ne.s32.totalorder %s178, %s192
      %p194 = scmp.eq.s32.totalorder %s21, 0
      %p195 = por %p193, %p194
      %s196 = ssub.s32 %s15, %s22
      %p197 = scmp.eq.s32.totalorder %s196, 0
      %s199 = sadd.s32 %s198, 1
      %s200 = scalar_select %p197, %s198, %s199
      %p203 = pneg %p197
      %p204 = scmp.eq.s32.totalorder %s15, 1
      %p205 = por %p203, %p204
      %p206 = scmp.ne.s32.totalorder %s198, %s201
      %p207 = scmp.eq.s32.totalorder %s15, 0
      %p208 = por %p206, %p207
      %p209 = scmp.ne.s32.totalorder %s198, %s201
      %p210 = scmp.eq.s32.totalorder %s20, 1
      %p211 = por %p209, %p210
      %p212 = scmp.ne.s32.totalorder %s201, %s202
      %p213 = scmp.eq.s32.totalorder %s20, 0
      %p214 = por %p212, %p213
      %p215 = scmp.ne.s32.totalorder %s201, %s202
      %p216 = scmp.eq.s32.totalorder %s21, 1
      %p217 = por %p215, %p216
      %p219 = scmp.ne.s32.totalorder %s202, %s218
      %p220 = scmp.eq.s32.totalorder %s21, 0
      %p221 = por %p219, %p220
      %p222 = scmp.le.s32.totalorder 1, %s15
      %p223 = scmp.lt.s32.totalorder %s15, 3
      %p224 = pnand %p222, %p223
      %p225 = pneg %p224
      // Predicated region
      $region9: #{tpu_custom_call.1} parent=5 // pred_check
        _
      $region10: #{tpu_custom_call.1} parent=5 // pred_check_branch
        %227 = sbr.rel (%p224) target = $region12
      $region11: #{tpu_custom_call.1} parent=5 // pred_region
        %s228 = ssub.s32 %s15, 1
        // Predicated region
        $region13: #{tpu_custom_call.1} parent=11 // pred_check
          %p229 = pneg %p62
        $region14: #{tpu_custom_call.1} parent=11 // pred_check_branch
          %231 = sbr.rel (%p229) target = $region16
        $region15: #{tpu_custom_call.1} parent=11 // pred_region
          _
        $region16: #{tpu_custom_call.1} parent=11 // pred_fallthru
          _
        // Predicated region
        $region17: #{tpu_custom_call.1} parent=11 // pred_check
          %p232 = pneg %p83
        $region18: #{tpu_custom_call.1} parent=11 // pred_check_branch
          %234 = sbr.rel (%p232) target = $region20
        $region19: #{tpu_custom_call.1} parent=11 // pred_region
          _
        $region20: #{tpu_custom_call.1} parent=11 // pred_fallthru
          _
        // Predicated region
        $region21: #{tpu_custom_call.1} parent=11 // pred_check
          %p235 = pneg %p104
        $region22: #{tpu_custom_call.1} parent=11 // pred_check_branch
          %237 = sbr.rel (%p235) target = $region24
        $region23: #{tpu_custom_call.1} parent=11 // pred_region
          _
        $region24: #{tpu_custom_call.1} parent=11 // pred_fallthru
          _
        // Predicated region
        $region25: #{tpu_custom_call.1} parent=11 // pred_check
          %p238 = pneg %p125
        $region26: #{tpu_custom_call.1} parent=11 // pred_check_branch
          %240 = sbr.rel (%p238) target = $region28
        $region27: #{tpu_custom_call.1} parent=11 // pred_region
          _
        $region28: #{tpu_custom_call.1} parent=11 // pred_fallthru
          _
        // Predicated region
        $region29: #{tpu_custom_call.1} parent=11 // pred_check
          %p241 = pneg %p146
        $region30: #{tpu_custom_call.1} parent=11 // pred_check_branch
          %243 = sbr.rel (%p241) target = $region32
        $region31: #{tpu_custom_call.1} parent=11 // pred_region
          _
        $region32: #{tpu_custom_call.1} parent=11 // pred_fallthru
          _
        // Predicated region
        $region33: #{tpu_custom_call.1} parent=11 // pred_check
          %p244 = pneg %p167
        $region34: #{tpu_custom_call.1} parent=11 // pred_check_branch
          %246 = sbr.rel (%p244) target = $region36
        $region35: #{tpu_custom_call.1} parent=11 // pred_region
          _
        $region36: #{tpu_custom_call.1} parent=11 // pred_fallthru
          _
        // Predicated region
        $region37: #{tpu_custom_call.1} parent=11 // pred_check
          %p247 = pneg %p188
        $region38: #{tpu_custom_call.1} parent=11 // pred_check_branch
          %249 = sbr.rel (%p247) target = $region40
        $region39: #{tpu_custom_call.1} parent=11 // pred_region
          %s251 = ssub.s32 16, 16
          %252 = vsyncadd [#allocation3], %s251
          %s254 = sshll.u32 %s7, 4
          %s255 = int_to_ptr.vmem [resolvable:$true] %s254
          %257 = dma.vmem_to_smem %s255, 16, [#allocation2], [#allocation3]
        $region40: #{tpu_custom_call.1} parent=11 // pred_fallthru
          _
      $region12: #{tpu_custom_call.1} parent=5 // pred_fallthru
        _
      %p258 = scmp.lt.s32.totalorder %s15, 2
      // Predicated region
      $region41: #{tpu_custom_call.1} parent=5 // pred_check
        %p259 = pneg %p258
      $region42: #{tpu_custom_call.1} parent=5 // pred_check_branch
        %261 = sbr.rel (%p259) target = $region44
      $region43: #{tpu_custom_call.1} parent=5 // pred_region
        // Predicated region
        $region45: #{tpu_custom_call.1} parent=43 // pred_check
          %p262 = pneg %p35
        $region46: #{tpu_custom_call.1} parent=43 // pred_check_branch
          %264 = sbr.rel (%p262) target = $region48
        $region47: #{tpu_custom_call.1} parent=43 // pred_region
          %p265 = scmp.lt.s32.totalorder %s15, 1
          %s266 = scalar_select %p265, %s15, 1
          %s267 = smul.addr %s266, 2
          %s268 = smul.addr %s267, 8
          %s269 = scalar_lea.vmem %s0, %s268
        $region48: #{tpu_custom_call.1} parent=43 // pred_fallthru
          _
      $region44: #{tpu_custom_call.1} parent=5 // pred_fallthru
        _
      %p270 = scmp.le.s32.totalorder 1, %s15
      %p271 = scmp.lt.s32.totalorder %s15, 3
      %p272 = pnand %p270, %p271
      %p273 = pneg %p272
      // Predicated region
      $region49: #{tpu_custom_call.1} parent=5 // pred_check
        _
      $region50: #{tpu_custom_call.1} parent=5 // pred_check_branch
        %275 = sbr.rel (%p272) target = $region52
      $region51: #{tpu_custom_call.1} parent=5 // pred_region
        %s276 = ssub.s32 %s15, 1
        // Predicated region
        $region53: #{tpu_custom_call.1} parent=51 // pred_check
          %p277 = pneg %p188
        $region54: #{tpu_custom_call.1} parent=51 // pred_check_branch
          %279 = sbr.rel (%p277) target = $region56
        $region55: #{tpu_custom_call.1} parent=51 // pred_region
          %280 = dma.done [#allocation3], 16
        $region56: #{tpu_custom_call.1} parent=51 // pred_fallthru
          _
        %281 = sfence
        %p282 = scmp.lt.s32.totalorder %s20, 1
        %s283 = scalar_select %p282, %s20, 1
        %s284 = smul.addr %s283, 2
        %s285 = smul.addr %s284, 8
        %s286 = scalar_lea.vmem %s0, %s285
        %p287 = pneg %p41
        %p288 = pneg %p38
        %p289 = pneg %p62
        %p290 = pneg %p59
        %p291 = pneg %p83
        %p292 = pneg %p80
        %p293 = pneg %p104
        %p294 = pneg %p101
        %p295 = pneg %p125
        %p296 = pneg %p122
        %p297 = pneg %p146
        %p298 = pneg %p143
        %p299 = pneg %p167
        %p300 = pneg %p164
        %p301 = pneg %p188
        %p302 = pneg %p185
        %p303 = pneg %p214
        %p304 = pneg %p211
        %p305 = scmp.lt.s32.totalorder %s20, 1
        %s306 = scalar_select %p305, %s20, 1
        %s307 = smul.addr %s306, 8
        %s308 = scalar_lea.vmem %s8, %s307
        %p309 = scmp.lt.s32.totalorder %s20, 1
        %s310 = scalar_select %p309, %s20, 1
        %s311 = smul.addr %s310, 2
        %s312 = smul.addr %s311, 8
        %s313 = scalar_lea.vmem %s0, %s312
        %p314 = scmp.lt.s32.totalorder %s20, 1
        %s315 = scalar_select %p314, %s20, 1
        %s316 = smul.addr %s315, 8
        %s317 = scalar_lea.vmem %s8, %s316
        %v319 = vld [vmem:[%s313] sm:$0xff]
        %v320 = vld [vmem:[%s313 + $0x8] sm:$0xff]
        %v321 = vpack.c.bf16 %v319, %v319
        %v322 = vpack.c.bf16 %v320, %v320
        %s323 = sld [smem:[#allocation2]]
        %p325 = scmp.ne.f32.partialorder %s323, %s323
        %s326 = sshrl.u32 %s323, 16
        %s327 = sand.u32 %s326, 1
        %s328 = sadd.s32 32767, %s327
        %s329 = sadd.s32 %s323, %s328
        %s330 = sand.u32 %s329, 4294901760
        %s331 = scalar_select %p325, 2143289344, %s330
        %s333 = sshrl.u32 %s331, 16
        %s334 = sld [smem:[#allocation2 + $0x1]]
        %v335 = vld [vmem:[%s1] sm:$0xf]
        %v336 = vld [vmem:[%s1 + $0x4] sm:$0xf]
        %v337 = vld [vmem:[%s1 + $0x8] sm:$0xf]
        %v338 = vld [vmem:[%s1 + $0xc] sm:$0xf]
        %v339 = vld [vmem:[%s1 + $0x10] sm:$0xf]
        %v340 = vld [vmem:[%s1 + $0x14] sm:$0xf]
        %v341 = vld [vmem:[%s1 + $0x18] sm:$0xf]
        %v342 = vld [vmem:[%s1 + $0x1c] sm:$0xf]
        %v343 = vld [vmem:[%s1 + $0x20] sm:$0xf]
        %v344 = vld [vmem:[%s1 + $0x24] sm:$0xf]
        %v345 = vld [vmem:[%s1 + $0x28] sm:$0xf]
        %v346 = vld [vmem:[%s1 + $0x2c] sm:$0xf]
        %v347 = vld [vmem:[%s1 + $0x30] sm:$0xf]
        %v348 = vld [vmem:[%s1 + $0x34] sm:$0xf]
        %v349 = vld [vmem:[%s1 + $0x38] sm:$0xf]
        %v350 = vld [vmem:[%s1 + $0x3c] sm:$0xf]
        %v351 = vld [vmem:[%s1 + $0x40] sm:$0xf]
        %v352 = vld [vmem:[%s1 + $0x44] sm:$0xf]
        %v353 = vld [vmem:[%s1 + $0x48] sm:$0xf]
        %v354 = vld [vmem:[%s1 + $0x4c] sm:$0xf]
        %v355 = vld [vmem:[%s1 + $0x50] sm:$0xf]
        %v356 = vld [vmem:[%s1 + $0x54] sm:$0xf]
        %v357 = vld [vmem:[%s1 + $0x58] sm:$0xf]
        %v358 = vld [vmem:[%s1 + $0x5c] sm:$0xf]
        %v359 = vld [vmem:[%s1 + $0x60] sm:$0xf]
        %v360 = vld [vmem:[%s1 + $0x64] sm:$0xf]
        %v361 = vld [vmem:[%s1 + $0x68] sm:$0xf]
        %v362 = vld [vmem:[%s1 + $0x6c] sm:$0xf]
        %v363 = vld [vmem:[%s1 + $0x70] sm:$0xf]
        %v364 = vld [vmem:[%s1 + $0x74] sm:$0xf]
        %v365 = vld [vmem:[%s1 + $0x78] sm:$0xf]
        %v366 = vld [vmem:[%s1 + $0x7c] sm:$0xf]
        %v367 = vld [vmem:[%s4] sm:$0x1]
        %v369 = vlaneseq
        %v370 = vshrl.u32 %v369, 7
        %v371 = vsub.s32 0, %v370
        %v372 = vrot.slane %v367, %v371
        %v406 = vunpack.c.l.b16 %v335
        %v407 = vunpack.c.l.b16 %v336
        %v408 = vunpack.c.l.b16 %v337
        %v409 = vunpack.c.l.b16 %v338
        %v410 = vunpack.c.l.b16 %v339
        %v411 = vunpack.c.l.b16 %v340
        %v412 = vunpack.c.l.b16 %v341
        %v413 = vunpack.c.l.b16 %v342
        %v414 = vunpack.c.l.b16 %v343
        %v415 = vunpack.c.l.b16 %v344
        %v416 = vunpack.c.l.b16 %v345
        %v417 = vunpack.c.l.b16 %v346
        %v418 = vunpack.c.l.b16 %v347
        %v419 = vunpack.c.l.b16 %v348
        %v420 = vunpack.c.l.b16 %v349
        %v421 = vunpack.c.l.b16 %v350
        %v422 = vunpack.c.l.b16 %v351
        %v423 = vunpack.c.l.b16 %v352
        %v424 = vunpack.c.l.b16 %v353
        %v425 = vunpack.c.l.b16 %v354
        %v426 = vunpack.c.l.b16 %v355
        %v427 = vunpack.c.l.b16 %v356
        %v428 = vunpack.c.l.b16 %v357
        %v429 = vunpack.c.l.b16 %v358
        %v430 = vunpack.c.l.b16 %v359
        %v431 = vunpack.c.l.b16 %v360
        %v432 = vunpack.c.l.b16 %v361
        %v433 = vunpack.c.l.b16 %v362
        %v434 = vunpack.c.l.b16 %v363
        %v435 = vunpack.c.l.b16 %v364
        %v436 = vunpack.c.l.b16 %v365
        %v437 = vunpack.c.l.b16 %v366
        %v438 = vpack.c.b16 %v407, %v406
        %v439 = vpack.c.b16 %v409, %v408
        %v440 = vpack.c.b16 %v411, %v410
        %v441 = vpack.c.b16 %v413, %v412
        %v442 = vpack.c.b16 %v415, %v414
        %v443 = vpack.c.b16 %v417, %v416
        %v444 = vpack.c.b16 %v419, %v418
        %v445 = vpack.c.b16 %v421, %v420
        %v446 = vpack.c.b16 %v423, %v422
        %v447 = vpack.c.b16 %v425, %v424
        %v448 = vpack.c.b16 %v427, %v426
        %v449 = vpack.c.b16 %v429, %v428
        %v450 = vpack.c.b16 %v431, %v430
        %v451 = vpack.c.b16 %v433, %v432
        %v452 = vpack.c.b16 %v435, %v434
        %v453 = vpack.c.b16 %v437, %v436
        %470 = vmatprep.subr.bf16.mxu0 0
        %471 = vmatpush1.bf16.msra.mxu0 %v438
        %472 = vmatprep.subr.bf16.mxu0 0
        %473 = vmatpush1.bf16.msra.mxu0 %v439
        %474 = vmatprep.subr.bf16.mxu0 0
        %475 = vmatpush1.bf16.msra.mxu0 %v440
        %476 = vmatprep.subr.bf16.mxu0 0
        %477 = vmatpush1.bf16.msra.mxu0 %v441
        %478 = vmatprep.subr.bf16.mxu0 0
        %479 = vmatpush1.bf16.msra.mxu0 %v442
        %480 = vmatprep.subr.bf16.mxu0 0
        %481 = vmatpush1.bf16.msra.mxu0 %v443
        %482 = vmatprep.subr.bf16.mxu0 0
        %483 = vmatpush1.bf16.msra.mxu0 %v444
        %484 = vmatprep.subr.bf16.mxu0 0
        %485 = vmatpush1.bf16.msra.mxu0 %v445
        %486 = vmatprep.subr.bf16.mxu0 0
        %487 = vmatpush1.bf16.msra.mxu0 %v446
        %488 = vmatprep.subr.bf16.mxu0 0
        %489 = vmatpush1.bf16.msra.mxu0 %v447
        %490 = vmatprep.subr.bf16.mxu0 0
        %491 = vmatpush1.bf16.msra.mxu0 %v448
        %492 = vmatprep.subr.bf16.mxu0 0
        %493 = vmatpush1.bf16.msra.mxu0 %v449
        %494 = vmatprep.subr.bf16.mxu0 0
        %495 = vmatpush1.bf16.msra.mxu0 %v450
        %496 = vmatprep.subr.bf16.mxu0 0
        %497 = vmatpush1.bf16.msra.mxu0 %v451
        %498 = vmatprep.subr.bf16.mxu0 0
        %499 = vmatpush1.bf16.msra.mxu0 %v452
        %500 = vmatprep.subr.bf16.mxu0 0
        %501 = vmatpush1.bf16.msra.mxu0 %v453
        %502 = vmatprep.mubr.bf16.mxu0 %v322
        %503 = vmatmul.mubr.bf16.gmra.mrb[0].mxu0 %v321
        %v504 = vpop.f32.mrb[0].mxu0
        %v505 = vadd.f32 %v372, %v504
        %v506 = vpop.f32.mrb[0].mxu0
        %v507 = vpop.f32.mrb[0].mxu0
        %v508 = vpop.f32.mrb[0].mxu0
        %509 = vdwg.mxu0
        %v510 = vpack.c.bf16 %v505, %v505
        %vm511 = vcmp.gt.bf16.partialorder %v510, 0
        %s512 = sshll.u32 %s333, 16
        %s513 = sor.u32 %s333, %s512
        %v514 = vstv %s513
        %v516 = vmul.bf16 %v514, %v510
        %v517 = vsel %vm511, %v510, %v516
        %v518 = vld [vmem:[%s2] sm:$0xf]
        %v519 = vld [vmem:[%s2 + $0x4] sm:$0xf]
        %v520 = vld [vmem:[%s2 + $0x8] sm:$0xf]
        %v521 = vld [vmem:[%s2 + $0xc] sm:$0xf]
        %v522 = vld [vmem:[%s2 + $0x10] sm:$0xf]
        %v523 = vld [vmem:[%s2 + $0x14] sm:$0xf]
        %v524 = vld [vmem:[%s2 + $0x18] sm:$0xf]
        %v525 = vld [vmem:[%s2 + $0x1c] sm:$0xf]
        %v526 = vld [vmem:[%s5] sm:$0x1]
        %v528 = vlaneseq
        %v529 = vshrl.u32 %v528, 7
        %v530 = vsub.s32 0, %v529
        %v531 = vrot.slane %v526, %v530
        %v541 = vunpack.c.l.b16 %v518
        %v542 = vunpack.c.l.b16 %v519
        %v543 = vunpack.c.l.b16 %v520
        %v544 = vunpack.c.l.b16 %v521
        %v545 = vunpack.c.l.b16 %v522
        %v546 = vunpack.c.l.b16 %v523
        %v547 = vunpack.c.l.b16 %v524
        %v548 = vunpack.c.l.b16 %v525
        %v549 = vpack.c.b16 %v542, %v541
        %v550 = vpack.c.b16 %v544, %v543
        %v551 = vpack.c.b16 %v546, %v545
        %v552 = vpack.c.b16 %v548, %v547
        %vm557 = vcmask 523264
        %v559 = vsel %vm557, %v517, 0
        %561 = vmatprep.subr.bf16.mxu0 0
        %562 = vmatpush1.bf16.msra.mxu0 %v549
        %563 = vmatprep.subr.bf16.mxu0 0
        %564 = vmatpush1.bf16.msra.mxu0 %v550
        %565 = vmatprep.subr.bf16.mxu0 0
        %566 = vmatpush1.bf16.msra.mxu0 %v551
        %567 = vmatprep.subr.bf16.mxu0 0
        %568 = vmatpush1.bf16.msra.mxu0 %v552
        %569 = vmatprep.subr.bf16.mxu0 0
        %570 = vmatpush1.bf16.msra.mxu0 0
        %571 = vmatprep.subr.bf16.mxu0 0
        %572 = vmatpush1.bf16.msra.mxu0 0
        %573 = vmatprep.subr.bf16.mxu0 0
        %574 = vmatpush1.bf16.msra.mxu0 0
        %575 = vmatprep.subr.bf16.mxu0 0
        %576 = vmatpush1.bf16.msra.mxu0 0
        %577 = vmatprep.subr.bf16.mxu0 0
        %578 = vmatpush1.bf16.msra.mxu0 0
        %579 = vmatprep.subr.bf16.mxu0 0
        %580 = vmatpush1.bf16.msra.mxu0 0
        %581 = vmatprep.subr.bf16.mxu0 0
        %582 = vmatpush1.bf16.msra.mxu0 0
        %583 = vmatprep.subr.bf16.mxu0 0
        %584 = vmatpush1.bf16.msra.mxu0 0
        %585 = vmatprep.subr.bf16.mxu0 0
        %586 = vmatpush1.bf16.msra.mxu0 0
        %587 = vmatprep.subr.bf16.mxu0 0
        %588 = vmatpush1.bf16.msra.mxu0 0
        %589 = vmatprep.subr.bf16.mxu0 0
        %590 = vmatpush1.bf16.msra.mxu0 0
        %591 = vmatprep.subr.bf16.mxu0 0
        %592 = vmatpush1.bf16.msra.mxu0 0
        %593 = vmatprep.mubr.bf16.mxu0 0
        %594 = vmatmul.mubr.bf16.gmra.mrb[0].mxu0 %v559
        %v595 = vpop.f32.mrb[0].mxu0
        %v596 = vadd.f32 %v531, %v595
        %v597 = vpop.f32.mrb[0].mxu0
        %v598 = vpop.f32.mrb[0].mxu0
        %v599 = vpop.f32.mrb[0].mxu0
        %600 = vdwg.mxu0
        %vm601 = vcmp.gt.f32.partialorder %v596, 0.0
        %v602 = vstv %s334
        %v603 = vmul.f32 %v602, %v596
        %v604 = vsel %vm601, %v596, %v603
        %v605 = vpack.c.bf16 %v604, %v604
        %v606 = vld [vmem:[%s3] sm:$0xf]
        %v607 = vld [vmem:[%s3 + $0x4] sm:$0xf]
        %v608 = vld [vmem:[%s6] sm:$0x1]
        %v610 = vlaneseq
        %v611 = vshrl.u32 %v610, 7
        %v612 = vsub.s32 0, %v611
        %v613 = vrot.slane %v608, %v612
        %v617 = vunpack.c.l.b16 %v606
        %v618 = vunpack.c.l.b16 %v607
        %v619 = vpack.c.b16 %v618, %v617
        %vm621 = vcmask 130048
        %v623 = vsel %vm621, %v605, 0
        %625 = vmatprep.subr.bf16.mxu0 0
        %626 = vmatpush1.bf16.msra.mxu0 %v619
        %627 = vmatprep.subr.bf16.mxu0 0
        %628 = vmatpush1.bf16.msra.mxu0 0
        %629 = vmatprep.subr.bf16.mxu0 0
        %630 = vmatpush1.bf16.msra.mxu0 0
        %631 = vmatprep.subr.bf16.mxu0 0
        %632 = vmatpush1.bf16.msra.mxu0 0
        %633 = vmatprep.subr.bf16.mxu0 0
        %634 = vmatpush1.bf16.msra.mxu0 0
        %635 = vmatprep.subr.bf16.mxu0 0
        %636 = vmatpush1.bf16.msra.mxu0 0
        %637 = vmatprep.subr.bf16.mxu0 0
        %638 = vmatpush1.bf16.msra.mxu0 0
        %639 = vmatprep.subr.bf16.mxu0 0
        %640 = vmatpush1.bf16.msra.mxu0 0
        %641 = vmatprep.subr.bf16.mxu0 0
        %642 = vmatpush1.bf16.msra.mxu0 0
        %643 = vmatprep.subr.bf16.mxu0 0
        %644 = vmatpush1.bf16.msra.mxu0 0
        %645 = vmatprep.subr.bf16.mxu0 0
        %646 = vmatpush1.bf16.msra.mxu0 0
        %647 = vmatprep.subr.bf16.mxu0 0
        %648 = vmatpush1.bf16.msra.mxu0 0
        %649 = vmatprep.subr.bf16.mxu0 0
        %650 = vmatpush1.bf16.msra.mxu0 0
        %651 = vmatprep.subr.bf16.mxu0 0
        %652 = vmatpush1.bf16.msra.mxu0 0
        %653 = vmatprep.subr.bf16.mxu0 0
        %654 = vmatpush1.bf16.msra.mxu0 0
        %655 = vmatprep.subr.bf16.mxu0 0
        %656 = vmatpush1.bf16.msra.mxu0 0
        %657 = vmatprep.mubr.bf16.mxu0 0
        %658 = vmatmul.mubr.bf16.gmra.mrb[0].mxu0 %v623
        %v659 = vpop.f32.mrb[0].mxu0
        %v660 = vadd.f32 %v613, %v659
        %v661 = vpop.f32.mrb[0].mxu0
        %v662 = vpop.f32.mrb[0].mxu0
        %v663 = vpop.f32.mrb[0].mxu0
        %664 = vdwg.mxu0
        %vm665 = vcmask 31744
        %666 = vst.msk [vmem:[%s317] sm:$0xff] %vm665, %v660
        %p667 = scmp.lt.s32.totalorder %s20, 1
        %s668 = scalar_select %p667, %s20, 1
        %s669 = smul.addr %s668, 8
        %s670 = scalar_lea.vmem %s8, %s669
        // Predicated region
        $region57: #{tpu_custom_call.1} parent=51 // pred_check
          %p671 = pneg %p211
        $region58: #{tpu_custom_call.1} parent=51 // pred_check_branch
          %673 = sbr.rel (%p671) target = $region60
        $region59: #{tpu_custom_call.1} parent=51 // pred_region
          _
        $region60: #{tpu_custom_call.1} parent=51 // pred_fallthru
          _
      $region52: #{tpu_custom_call.1} parent=5 // pred_fallthru
        _
      %p674 = scmp.le.s32.totalorder 2, %s15
      // Predicated region
      $region61: #{tpu_custom_call.1} parent=5 // pred_check
        %p675 = pneg %p674
      $region62: #{tpu_custom_call.1} parent=5 // pred_check_branch
        %677 = sbr.rel (%p675) target = $region64
      $region63: #{tpu_custom_call.1} parent=5 // pred_region
        %s678 = ssub.s32 %s15, 2
        // Predicated region
        $region65: #{tpu_custom_call.1} parent=63 // pred_check
          %p679 = pneg %p217
        $region66: #{tpu_custom_call.1} parent=63 // pred_check_branch
          %681 = sbr.rel (%p679) target = $region68
        $region67: #{tpu_custom_call.1} parent=63 // pred_region
          %p682 = scmp.lt.s32.totalorder %s21, 1
          %s683 = scalar_select %p682, %s21, 1
          %s684 = smul.addr %s683, 8
          %s685 = scalar_lea.vmem %s8, %s684
        $region68: #{tpu_custom_call.1} parent=63 // pred_fallthru
          _
      $region64: #{tpu_custom_call.1} parent=5 // pred_fallthru
        _
    $region6: #{tpu_custom_call.1} parent=1 // loop_footer
      %s19 = sadd.s32 1, %s15
    $region7: #{tpu_custom_call.1} parent=1 // loop_footer_branch
      %14 = sbr.rel target = $region3
    $region8: #{tpu_custom_call.1} parent=1 // loop_exit
      _
    %686 = vsyncpa [#allocation3], 1
    %s687 = scalar_lea.sflag [#allocation3], 1
    %688 = vsyncpa %s687, 1

</llo_original>
